<compile_context>
chip_gen: v5e
topology: v5e:2x2
jax: 0.10.0
libtpu: 0.0.40
codegen_flags: <defaults>
</compile_context>

<pallas_src>
import jax
import jax.numpy as jnp
from jax.experimental import pallas as pl
from jax.experimental.pallas import tpu as pltpu


NEG_LARGE = -1e30  # bias padding; exp(NEG_LARGE - m) underflows to exactly 0


def _recombinator_kernel(w0_ref, w1_ref, w2_ref, w3_ref, wc_ref, bc_ref, out_ref):
    in_f = w0_ref.shape[1]

    # Collapsed branch+final Linear:
    #   logits = [w0|w1|w2|w3] @ W_comb + b_comb
    # expressed as 4 partial dots against static (sublane-aligned) row slices
    # of W_comb so the host never materializes the concatenated input.
    logits = bc_ref[...]  # (1, CP) f32, broadcasts over the batch tile
    for i, w_ref in enumerate((w0_ref, w1_ref, w2_ref, w3_ref)):
        xi = w_ref[...].astype(jnp.bfloat16)                 # bf16 MXU inputs
        wi = wc_ref[i * in_f:(i + 1) * in_f, :]              # static bf16 slice
        logits = logits + jnp.dot(xi, wi, preferred_element_type=jnp.float32)

    # Numerically stable softmax over the class (lane) axis.
    # Exact divide (not approx reciprocal) so rows sum to 1 within f32 rounding;
    # at [tb, 128] the VPU cost is negligible and EUP was never the bottleneck.
    m = jnp.max(logits, axis=-1, keepdims=True)
    e = jnp.exp(logits - m)                                  # padded lanes -> 0
    s = jnp.sum(e, axis=-1, keepdims=True)
    out_ref[...] = e / s


def concat_recombinator_forward(w0, w1, w2, w3, w_comb, b_comb, *, batch_tile=None):
    """Fused forward. Returns the lane-padded softmax [B, CP]; slice [:, :C] outside.

    w0..w3: f32 [B, in_features]; w_comb: bf16 [4*in, CP]; b_comb: f32 [1, CP].
    """
    B, in_f = w0.shape
    K, CP = w_comb.shape

    tb = B if batch_tile is None else batch_tile
    assert B % tb == 0, "batch_tile must divide batch"
    # (8,128) sublane rule for the (tb, *) blocks of f32 inputs / outputs.
    assert tb == B or tb % 8 == 0, "batch_tile must be a multiple of 8 or equal B"
    grid = (B // tb,)

    flops = 2 * B * K * CP
    transcendentals = B * CP                                     # exp lanes
    bytes_accessed = (4 * 4 * B * in_f          # four f32 branch inputs
                      + 2 * w_comb.size         # bf16 collapsed weight
                      + 4 * b_comb.size         # f32 bias
                      + 4 * B * CP)             # f32 output

    return pl.pallas_call(
        _recombinator_kernel,
        out_shape=jax.ShapeDtypeStruct((B, CP), jnp.float32),
        grid=grid,
        in_specs=[
            pl.BlockSpec((tb, in_f), lambda i: (i, 0)),
            pl.BlockSpec((tb, in_f), lambda i: (i, 0)),
            pl.BlockSpec((tb, in_f), lambda i: (i, 0)),
            pl.BlockSpec((tb, in_f), lambda i: (i, 0)),
            pl.BlockSpec((K, CP), lambda i: (0, 0)),     # grid-invariant weight
            pl.BlockSpec((1, CP), lambda i: (0, 0)),     # grid-invariant bias
        ],
        out_specs=pl.BlockSpec((tb, CP), lambda i: (i, 0)),
        compiler_params=pltpu.CompilerParams(
            dimension_semantics=("parallel",)),
        cost_estimate=pl.CostEstimate(
            flops=flops,
            transcendentals=transcendentals,
            bytes_accessed=bytes_accessed),
    )(w0, w1, w2, w3, w_comb, b_comb)


def init_params(key, in_features, hidden, num_classes):
    """nn.Linear-style init (uniform +-1/sqrt(fan_in)), then collapse + pad.

    The collapse W_comb = blockdiag(W_0..W_3)^T @ Wf^T is exact at inference
    (dropout identity, no inter-layer activation) and avoids ever forming the
    75%-zero block-diagonal weight.  Classes are lane-padded to 128 with zero
    weight columns and a -1e30 bias so padded softmax lanes are exactly 0.
    """
    ks = jax.random.split(key, 10)
    lim_b = 1.0 / jnp.sqrt(jnp.float32(in_features))
    lim_f = 1.0 / jnp.sqrt(jnp.float32(4 * hidden))

    def uni(k, shape, lim):
        return jax.random.uniform(k, shape, jnp.float32, -lim, lim)

    wts = [uni(ks[2 * i], (in_features, hidden), lim_b) for i in range(4)]   # W_i^T
    bs = [uni(ks[2 * i + 1], (1, hidden), lim_b) for i in range(4)]
    wf = uni(ks[8], (4 * hidden, num_classes), lim_f)                         # Wf^T
    bf = uni(ks[9], (1, num_classes), lim_f)

    CP = ((num_classes + 127) // 128) * 128
    wf_p = jnp.zeros((4 * hidden, CP), jnp.float32).at[:, :num_classes].set(wf)
    bf_p = jnp.full((1, CP), NEG_LARGE, jnp.float32).at[:, :num_classes].set(bf)

    # Collapsed weight, computed block-wise (never builds the block-diagonal).
    blocks = [wts[i] @ wf_p[i * hidden:(i + 1) * hidden, :] for i in range(4)]
    w_comb = jnp.concatenate(blocks, axis=0)                    # [4*in, CP] f32
    bcat = jnp.concatenate(bs, axis=1)                          # [1, 4*H]
    b_comb = bcat @ wf_p + bf_p                                 # [1, CP] (pad = -1e30)

    return {
        "w_comb_bf16": w_comb.astype(jnp.bfloat16),             # bf16 MXU weight
        "b_comb": b_comb,                                       # f32 bias
        # unpacked copies kept only for the pure-JAX reference
        "wts": wts, "bs": bs, "wf": wf, "bf": bf,
    }


def reference_forward(w0, w1, w2, w3, params):
    """Pure-JAX f32 reference matching the PyTorch spec (unfused)."""
    hs = [w @ params["wts"][i] + params["bs"][i]
          for i, w in enumerate((w0, w1, w2, w3))]
    c = jnp.concatenate(hs, axis=1)
    logits = c @ params["wf"] + params["bf"]
    return jax.nn.softmax(logits, axis=1)


if __name__ == "__main__":
    B = 8
    in_features = 32
    hidden = 32          # hidden_linear_size default
    num_classes = 16

    key = jax.random.PRNGKey(0)
    k_in, k_p = jax.random.split(key)
    kw = jax.random.split(k_in, 4)
    w0 = jax.random.normal(kw[0], (B, in_features), jnp.float32)
    w1 = jax.random.normal(kw[1], (B, in_features), jnp.float32)
    w2 = jax.random.normal(kw[2], (B, in_features), jnp.float32)
    w3 = jax.random.normal(kw[3], (B, in_features), jnp.float32)

    params = init_params(k_p, in_features, hidden, num_classes)

    # jit the whole wrapper so nothing around the pallas_call dispatches eagerly.
    fwd = jax.jit(lambda a, b, c, d: concat_recombinator_forward(
        a, b, c, d, params["w_comb_bf16"], params["b_comb"]))

    out_padded = jax.block_until_ready(fwd(w0, w1, w2, w3))     # [B, 128]
    out = out_padded[:, :num_classes]                            # consumer-side slice

    ref = reference_forward(w0, w1, w2, w3, params)
    assert out.shape == (B, num_classes)
    # bf16 weight quantization in the collapsed matmul -> relaxed tolerance
    assert jnp.allclose(out, ref, atol=1e-2, rtol=0.0), "mismatch vs f32 reference"
    # exact divide in the softmax: rows sum to 1 up to f32 rounding
    assert jnp.allclose(jnp.sum(out, axis=1), jnp.ones((B,)), atol=1e-4)

    print("KERNEL_OK")
</pallas_src>

<mosaic_0001>
module attributes {stable_mosaic.version = 11 : i64} {
  func.func @_recombinator_kernel(%arg0: i32, %arg1: memref<8x32xf32, #tpu.memory_space<vmem>>, %arg2: memref<8x32xf32, #tpu.memory_space<vmem>>, %arg3: memref<8x32xf32, #tpu.memory_space<vmem>>, %arg4: memref<8x32xf32, #tpu.memory_space<vmem>>, %arg5: memref<128x128xbf16, #tpu.memory_space<vmem>>, %arg6: memref<1x128xf32, #tpu.memory_space<vmem>>, %arg7: memref<8x128xf32, #tpu.memory_space<vmem>>) attributes {dimension_semantics = [#tpu.dimension_semantics<parallel>], iteration_bounds = array<i64: 1>, scalar_prefetch = 0 : i64, scratch_operands = 0 : i64, tpu.core_type = #tpu.core_type<tc>, window_params = [{transform_indices = @transform_0, window_bounds = array<i64: 8, 32>}, {transform_indices = @transform_1, window_bounds = array<i64: 8, 32>}, {transform_indices = @transform_2, window_bounds = array<i64: 8, 32>}, {transform_indices = @transform_3, window_bounds = array<i64: 8, 32>}, {pipeline_mode = #tpu.pipeline_mode<synchronous>, transform_indices = @transform_4, window_bounds = array<i64: 128, 128>}, {pipeline_mode = #tpu.pipeline_mode<synchronous>, transform_indices = @transform_5, window_bounds = array<i64: 1, 128>}, {transform_indices = @transform_6, window_bounds = array<i64: 8, 128>}]} {
    %c0 = arith.constant 0 : index
    %c0_0 = arith.constant 0 : index
    %0 = vector.load %arg6[%c0, %c0_0] : memref<1x128xf32, #tpu.memory_space<vmem>>, vector<1x128xf32>
    %c0_1 = arith.constant 0 : index
    %c0_2 = arith.constant 0 : index
    %1 = vector.load %arg1[%c0_1, %c0_2] : memref<8x32xf32, #tpu.memory_space<vmem>>, vector<8x32xf32>
    %2 = arith.truncf %1 : vector<8x32xf32> to vector<8x32xbf16>
    %c0_3 = arith.constant 0 : index
    %c0_4 = arith.constant 0 : index
    %3 = vector.load %arg5[%c0_3, %c0_4] : memref<128x128xbf16, #tpu.memory_space<vmem>>, vector<32x128xbf16>
    %cst = arith.constant dense<0.000000e+00> : vector<8x128xf32>
    %4 = tpu.matmul %2, %3, %cst {dimension_numbers = #tpu.dot_dimension_numbers<[1], [0], [0], [1], [0, 0, 1, 1], [], []>} : vector<8x32xbf16>, vector<32x128xbf16>, vector<8x128xf32> -> vector<8x128xf32>
    %5 = vector.broadcast %0 : vector<1x128xf32> to vector<8x128xf32>
    %6 = arith.addf %5, %4 : vector<8x128xf32>
    %c0_5 = arith.constant 0 : index
    %c0_6 = arith.constant 0 : index
    %7 = vector.load %arg2[%c0_5, %c0_6] : memref<8x32xf32, #tpu.memory_space<vmem>>, vector<8x32xf32>
    %8 = arith.truncf %7 : vector<8x32xf32> to vector<8x32xbf16>
    %c32 = arith.constant 32 : index
    %c0_7 = arith.constant 0 : index
    %9 = vector.load %arg5[%c32, %c0_7] : memref<128x128xbf16, #tpu.memory_space<vmem>>, vector<32x128xbf16>
    %cst_8 = arith.constant dense<0.000000e+00> : vector<8x128xf32>
    %10 = tpu.matmul %8, %9, %cst_8 {dimension_numbers = #tpu.dot_dimension_numbers<[1], [0], [0], [1], [0, 0, 1, 1], [], []>} : vector<8x32xbf16>, vector<32x128xbf16>, vector<8x128xf32> -> vector<8x128xf32>
    %11 = arith.addf %6, %10 : vector<8x128xf32>
    %c0_9 = arith.constant 0 : index
    %c0_10 = arith.constant 0 : index
    %12 = vector.load %arg3[%c0_9, %c0_10] : memref<8x32xf32, #tpu.memory_space<vmem>>, vector<8x32xf32>
    %13 = arith.truncf %12 : vector<8x32xf32> to vector<8x32xbf16>
    %c64 = arith.constant 64 : index
    %c0_11 = arith.constant 0 : index
    %14 = vector.load %arg5[%c64, %c0_11] : memref<128x128xbf16, #tpu.memory_space<vmem>>, vector<32x128xbf16>
    %cst_12 = arith.constant dense<0.000000e+00> : vector<8x128xf32>
    %15 = tpu.matmul %13, %14, %cst_12 {dimension_numbers = #tpu.dot_dimension_numbers<[1], [0], [0], [1], [0, 0, 1, 1], [], []>} : vector<8x32xbf16>, vector<32x128xbf16>, vector<8x128xf32> -> vector<8x128xf32>
    %16 = arith.addf %11, %15 : vector<8x128xf32>
    %c0_13 = arith.constant 0 : index
    %c0_14 = arith.constant 0 : index
    %17 = vector.load %arg4[%c0_13, %c0_14] : memref<8x32xf32, #tpu.memory_space<vmem>>, vector<8x32xf32>
    %18 = arith.truncf %17 : vector<8x32xf32> to vector<8x32xbf16>
    %c96 = arith.constant 96 : index
    %c0_15 = arith.constant 0 : index
    %19 = vector.load %arg5[%c96, %c0_15] : memref<128x128xbf16, #tpu.memory_space<vmem>>, vector<32x128xbf16>
    %cst_16 = arith.constant dense<0.000000e+00> : vector<8x128xf32>
    %20 = tpu.matmul %18, %19, %cst_16 {dimension_numbers = #tpu.dot_dimension_numbers<[1], [0], [0], [1], [0, 0, 1, 1], [], []>} : vector<8x32xbf16>, vector<32x128xbf16>, vector<8x128xf32> -> vector<8x128xf32>
    %21 = arith.addf %16, %20 : vector<8x128xf32>
    %cst_17 = arith.constant dense<0xFF800000> : vector<8xf32>
    %22 = vector.multi_reduction <maximumf>, %21, %cst_17 [1] : vector<8x128xf32> to vector<8xf32>
    %23 = vector.shape_cast %22 : vector<8xf32> to vector<8x1xf32>
    %24 = vector.broadcast %23 : vector<8x1xf32> to vector<8x128xf32>
    %25 = arith.subf %21, %24 : vector<8x128xf32>
    %26 = math.exp %25 : vector<8x128xf32>
    %cst_18 = arith.constant dense<0.000000e+00> : vector<8xf32>
    %27 = vector.multi_reduction <add>, %26, %cst_18 [1] : vector<8x128xf32> to vector<8xf32>
    %28 = vector.shape_cast %27 : vector<8xf32> to vector<8x1xf32>
    %29 = vector.broadcast %28 : vector<8x1xf32> to vector<8x128xf32>
    %30 = arith.divf %26, %29 : vector<8x128xf32>
    %c0_19 = arith.constant 0 : index
    %c0_20 = arith.constant 0 : index
    %31 = vector.load %arg7[%c0_19, %c0_20] : memref<8x128xf32, #tpu.memory_space<vmem>>, vector<8x128xf32>
    tpu.vector_store %arg7[%c0_19, %c0_20], %30 {strides = array<i32>} : memref<8x128xf32, #tpu.memory_space<vmem>>, vector<8x128xf32>,
    return
  }
  func.func @transform_0(%arg0: i32) -> (i32, i32) {
    %c0_i32 = arith.constant 0 : i32
    %c0_i32_0 = arith.constant 0 : i32
    return %arg0, %c0_i32 : i32, i32
  }
  func.func @transform_1(%arg0: i32) -> (i32, i32) {
    %c0_i32 = arith.constant 0 : i32
    %c0_i32_0 = arith.constant 0 : i32
    return %arg0, %c0_i32 : i32, i32
  }
  func.func @transform_2(%arg0: i32) -> (i32, i32) {
    %c0_i32 = arith.constant 0 : i32
    %c0_i32_0 = arith.constant 0 : i32
    return %arg0, %c0_i32 : i32, i32
  }
  func.func @transform_3(%arg0: i32) -> (i32, i32) {
    %c0_i32 = arith.constant 0 : i32
    %c0_i32_0 = arith.constant 0 : i32
    return %arg0, %c0_i32 : i32, i32
  }
  func.func @transform_4(%arg0: i32) -> (i32, i32) {
    %c0_i32 = arith.constant 0 : i32
    %c0_i32_0 = arith.constant 0 : i32
    %c0_i32_1 = arith.constant 0 : i32
    return %c0_i32, %c0_i32_0 : i32, i32
  }
  func.func @transform_5(%arg0: i32) -> (i32, i32) {
    %c0_i32 = arith.constant 0 : i32
    %c0_i32_0 = arith.constant 0 : i32
    %c0_i32_1 = arith.constant 0 : i32
    return %c0_i32, %c0_i32_0 : i32, i32
  }
  func.func @transform_6(%arg0: i32) -> (i32, i32) {
    %c0_i32 = arith.constant 0 : i32
    %c0_i32_0 = arith.constant 0 : i32
    return %arg0, %c0_i32 : i32, i32
  }
}

</mosaic_0001>

<llo_original>
// kernel: _lambda_.1
$region0: #{_lambda_.1}
  #allocation0 [shape = 'u32[]', space=smem, size = 0x4, offset = 0x4, fixed_abs, tag = 'smem constant byte address 0x4 - core index']
  #allocation1 [shape = 'u32[72,128]{1,0:T(1,128)}', space=vmem, size = 0x9000, scoped, tag = 'internal scratch']
  %s0 = inlined_call_operand.hbm [shape: f32[8,32], index: 0, kind: input, shape index: {}]
  %s1 = inlined_call_operand.hbm [shape: f32[8,32], index: 1, kind: input, shape index: {}]
  %s2 = inlined_call_operand.hbm [shape: f32[8,32], index: 2, kind: input, shape index: {}]
  %s3 = inlined_call_operand.hbm [shape: f32[8,32], index: 3, kind: input, shape index: {}]
  %s4 = inlined_call_operand.hbm [shape: bf16[128,128], index: 4, kind: input, shape index: {}]
  %s5 = inlined_call_operand.vmem [shape: f32[1,128], index: 5, kind: input, shape index: {}]
  %s6 = inlined_call_operand.hbm [shape: f32[8,128], index: 6, kind: output, shape index: {}]
  %s7 = sld [smem:[#allocation0]]
  $region54: #{_lambda_.1} parent=0
    _
  %s9 = ssub.s32 1, %s7
  %s10 = scalar_select 0, %s9, %s7
  $region1: #{_lambda_.1} parent=0
    #allocation2 [shape = 'u8[4096]{0}', space=vmem, size = 0x1000, scoped, tag = 'input window, operand 0, single buffered']
    #allocation3 [shape = 's32[1]{0}', space=sflag, size = 0x4, scoped, tag = 'scoped memory for _lambda_.1']
    #allocation4 [shape = 's32[1]{0}', space=sflag, size = 0x4, scoped, tag = 'scoped memory for _lambda_.1']
    #allocation5 [shape = 'u8[4096]{0}', space=vmem, size = 0x1000, scoped, tag = 'input window, operand 1, single buffered']
    #allocation6 [shape = 's32[1]{0}', space=sflag, size = 0x4, scoped, tag = 'scoped memory for _lambda_.1']
    #allocation7 [shape = 'u8[4096]{0}', space=vmem, size = 0x1000, scoped, tag = 'input window, operand 2, single buffered']
    #allocation8 [shape = 'u8[4096]{0}', space=vmem, size = 0x1000, scoped, tag = 'input window, operand 3, single buffered']
    #allocation9 [shape = 's32[1]{0}', space=sflag, size = 0x4, scoped, tag = 'scoped memory for _lambda_.1']
    #allocation10 [shape = 'u8[32768]{0}', space=vmem, size = 0x8000, scoped, tag = 'input window, operand 4, single buffered']
    #allocation11 [shape = 'u8[4096]{0}', space=vmem, size = 0x1000, scoped, tag = 'output window, operand 0, single buffered']
    %11 = vsyncpa [#allocation3], 0
    %12 = vsyncpa [#allocation6], 0
    %13 = vsyncpa [#allocation9], 0
    %14 = vsyncpa [#allocation4], 0
    // Predicated region
    $region2: #{_lambda_.1} parent=1 // pred_check
      _
    $region3: #{_lambda_.1} parent=1 // pred_check_branch
      %16 = sbr.rel (0) target = $region5
    $region4: #{_lambda_.1} parent=1 // pred_region
      %18 = vsyncadd [#allocation3], 0
      %s20 = sshll.u32 %s0, 4
      %s21 = int_to_ptr.hbm [resolvable:$true] %s20
      %s22 = sshll.u32 [#allocation2], 4
      %s23 = int_to_ptr.vmem [resolvable:$true] %s22
      %25 = dma.hbm_to_vmem [thread:$0]  %s21, 128, %s23, [#allocation3]
    $region5: #{_lambda_.1} parent=1 // pred_fallthru
      _
    // Predicated region
    $region6: #{_lambda_.1} parent=1 // pred_check
      _
    $region7: #{_lambda_.1} parent=1 // pred_check_branch
      %27 = sbr.rel (0) target = $region9
    $region8: #{_lambda_.1} parent=1 // pred_region
      %29 = vsyncadd [#allocation6], 0
      %s31 = sshll.u32 %s1, 4
      %s32 = int_to_ptr.hbm [resolvable:$true] %s31
      %s33 = sshll.u32 [#allocation5], 4
      %s34 = int_to_ptr.vmem [resolvable:$true] %s33
      %36 = dma.hbm_to_vmem [thread:$0]  %s32, 128, %s34, [#allocation6]
    $region9: #{_lambda_.1} parent=1 // pred_fallthru
      _
    // Predicated region
    $region10: #{_lambda_.1} parent=1 // pred_check
      _
    $region11: #{_lambda_.1} parent=1 // pred_check_branch
      %38 = sbr.rel (0) target = $region13
    $region12: #{_lambda_.1} parent=1 // pred_region
      %40 = vsyncadd [#allocation6], 0
      %s42 = sshll.u32 %s2, 4
      %s43 = int_to_ptr.hbm [resolvable:$true] %s42
      %s44 = sshll.u32 [#allocation7], 4
      %s45 = int_to_ptr.vmem [resolvable:$true] %s44
      %47 = dma.hbm_to_vmem [thread:$0]  %s43, 128, %s45, [#allocation6]
    $region13: #{_lambda_.1} parent=1 // pred_fallthru
      _
    // Predicated region
    $region14: #{_lambda_.1} parent=1 // pred_check
      _
    $region15: #{_lambda_.1} parent=1 // pred_check_branch
      %49 = sbr.rel (0) target = $region17
    $region16: #{_lambda_.1} parent=1 // pred_region
      %51 = vsyncadd [#allocation9], 0
      %s53 = sshll.u32 %s3, 4
      %s54 = int_to_ptr.hbm [resolvable:$true] %s53
      %s55 = sshll.u32 [#allocation8], 4
      %s56 = int_to_ptr.vmem [resolvable:$true] %s55
      %58 = dma.hbm_to_vmem [thread:$0]  %s54, 128, %s56, [#allocation9]
    $region17: #{_lambda_.1} parent=1 // pred_fallthru
      _
    // Predicated region
    $region18: #{_lambda_.1} parent=1 // pred_check
      _
    $region19: #{_lambda_.1} parent=1 // pred_check_branch
      %60 = sbr.rel (0) target = $region21
    $region20: #{_lambda_.1} parent=1 // pred_region
      %62 = vsyncadd [#allocation9], 0
      %s63 = sshll.u32 %s4, 4
      %s64 = int_to_ptr.hbm [resolvable:$true] %s63
      %s65 = sshll.u32 [#allocation10], 4
      %s66 = int_to_ptr.vmem [resolvable:$true] %s65
      %71 = dma.hbm_to_vmem [thread:$0]  %s64, 1024, %s66, [#allocation9], 64, 64, 4
    $region21: #{_lambda_.1} parent=1 // pred_fallthru
      _
    // Predicated region
    $region22: #{_lambda_.1} parent=1 // pred_check
      _
    $region23: #{_lambda_.1} parent=1 // pred_check_branch
      %73 = sbr.rel (0) target = $region25
    $region24: #{_lambda_.1} parent=1 // pred_region
      _
    $region25: #{_lambda_.1} parent=1 // pred_fallthru
      _
    // Predicated region
    $region26: #{_lambda_.1} parent=1 // pred_check
      _
    $region27: #{_lambda_.1} parent=1 // pred_check_branch
      %75 = sbr.rel (0) target = $region29
    $region28: #{_lambda_.1} parent=1 // pred_region
      %77 = dma.done [#allocation3], 128
    $region29: #{_lambda_.1} parent=1 // pred_fallthru
      _
    // Predicated region
    $region30: #{_lambda_.1} parent=1 // pred_check
      _
    $region31: #{_lambda_.1} parent=1 // pred_check_branch
      %79 = sbr.rel (0) target = $region33
    $region32: #{_lambda_.1} parent=1 // pred_region
      %81 = dma.done [#allocation6], 128
    $region33: #{_lambda_.1} parent=1 // pred_fallthru
      _
    // Predicated region
    $region34: #{_lambda_.1} parent=1 // pred_check
      _
    $region35: #{_lambda_.1} parent=1 // pred_check_branch
      %83 = sbr.rel (0) target = $region37
    $region36: #{_lambda_.1} parent=1 // pred_region
      %85 = dma.done [#allocation6], 128
    $region37: #{_lambda_.1} parent=1 // pred_fallthru
      _
    // Predicated region
    $region38: #{_lambda_.1} parent=1 // pred_check
      _
    $region39: #{_lambda_.1} parent=1 // pred_check_branch
      %87 = sbr.rel (0) target = $region41
    $region40: #{_lambda_.1} parent=1 // pred_region
      %89 = dma.done [#allocation9], 128
    $region41: #{_lambda_.1} parent=1 // pred_fallthru
      _
    // Predicated region
    $region42: #{_lambda_.1} parent=1 // pred_check
      _
    $region43: #{_lambda_.1} parent=1 // pred_check_branch
      %91 = sbr.rel (0) target = $region45
    $region44: #{_lambda_.1} parent=1 // pred_region
      %93 = dma.done [#allocation9], 1024
    $region45: #{_lambda_.1} parent=1 // pred_fallthru
      _
    %v95 = vld [vmem:[%s5] sm:$0x1]
    %v96 = vld [vmem:[#allocation2] sm:$0xff]
    %v97 = vpack.c.bf16 %v96, %v96
    %v98 = vld [vmem:[#allocation10] sm:$0xf]
    %v99 = vld [vmem:[#allocation10 + $0x4] sm:$0xf]
    %v100 = vld [vmem:[#allocation10 + $0x8] sm:$0xf]
    %v101 = vld [vmem:[#allocation10 + $0xc] sm:$0xf]
    %v106 = vunpack.c.l.b16 %v98
    %v107 = vunpack.c.l.b16 %v99
    %v108 = vunpack.c.l.b16 %v100
    %v109 = vunpack.c.l.b16 %v101
    %v110 = vpack.c.b16 %v107, %v106
    %v111 = vpack.c.b16 %v109, %v108
    %vm114 = vcmask 261120
    %v116 = vsel %vm114, %v97, 0
    %118 = vmatpush.bf16.msra.mxu0 0
    %119 = vmatpush.bf16.msra.mxu0 0
    %120 = vmatpush.bf16.msra.mxu0 0
    %121 = vmatpush.bf16.msra.mxu0 0
    %122 = vmatpush.bf16.msra.mxu0 0
    %123 = vmatpush.bf16.msra.mxu0 0
    %124 = vmatpush.bf16.msra.mxu0 %v111
    %125 = vmatpush.bf16.msra.mxu0 %v110
    %126 = vmatmul.bf16.gmra.mxu0 %v116
    %v127 = vpop.f32.mrf.mxu0
    %v128 = vadd.f32 0.0, %v127
    %v129 = vpop.f32.mrf.mxu0
    %130 = vdwg.mxu0
    %v132 = vperm.slane %v95, 0
    %v134 = vadd.f32 %v132, %v128
    %v135 = vld [vmem:[#allocation5] sm:$0xff]
    %v136 = vpack.c.bf16 %v135, %v135
    %v137 = vld [vmem:[#allocation10 + $0x10] sm:$0xf]
    %v138 = vld [vmem:[#allocation10 + $0x14] sm:$0xf]
    %v139 = vld [vmem:[#allocation10 + $0x18] sm:$0xf]
    %v140 = vld [vmem:[#allocation10 + $0x1c] sm:$0xf]
    %v145 = vunpack.c.l.b16 %v137
    %v146 = vunpack.c.l.b16 %v138
    %v147 = vunpack.c.l.b16 %v139
    %v148 = vunpack.c.l.b16 %v140
    %v149 = vpack.c.b16 %v146, %v145
    %v150 = vpack.c.b16 %v148, %v147
    %v154 = vsel %vm114, %v136, 0
    %156 = vmatpush.bf16.msra.mxu0 0
    %157 = vmatpush.bf16.msra.mxu0 0
    %158 = vmatpush.bf16.msra.mxu0 0
    %159 = vmatpush.bf16.msra.mxu0 0
    %160 = vmatpush.bf16.msra.mxu0 0
    %161 = vmatpush.bf16.msra.mxu0 0
    %162 = vmatpush.bf16.msra.mxu0 %v150
    %163 = vmatpush.bf16.msra.mxu0 %v149
    %164 = vmatmul.bf16.gmra.mxu0 %v154
    %v165 = vpop.f32.mrf.mxu0
    %v166 = vadd.f32 0.0, %v165
    %v167 = vpop.f32.mrf.mxu0
    %168 = vdwg.mxu0
    %v169 = vadd.f32 %v134, %v166
    %v170 = vld [vmem:[#allocation7] sm:$0xff]
    %v171 = vpack.c.bf16 %v170, %v170
    %v172 = vld [vmem:[#allocation10 + $0x20] sm:$0xf]
    %v173 = vld [vmem:[#allocation10 + $0x24] sm:$0xf]
    %v174 = vld [vmem:[#allocation10 + $0x28] sm:$0xf]
    %v175 = vld [vmem:[#allocation10 + $0x2c] sm:$0xf]
    %v180 = vunpack.c.l.b16 %v172
    %v181 = vunpack.c.l.b16 %v173
    %v182 = vunpack.c.l.b16 %v174
    %v183 = vunpack.c.l.b16 %v175
    %v184 = vpack.c.b16 %v181, %v180
    %v185 = vpack.c.b16 %v183, %v182
    %v189 = vsel %vm114, %v171, 0
    %191 = vmatpush.bf16.msra.mxu0 0
    %192 = vmatpush.bf16.msra.mxu0 0
    %193 = vmatpush.bf16.msra.mxu0 0
    %194 = vmatpush.bf16.msra.mxu0 0
    %195 = vmatpush.bf16.msra.mxu0 0
    %196 = vmatpush.bf16.msra.mxu0 0
    %197 = vmatpush.bf16.msra.mxu0 %v185
    %198 = vmatpush.bf16.msra.mxu0 %v184
    %199 = vmatmul.bf16.gmra.mxu0 %v189
    %v200 = vpop.f32.mrf.mxu0
    %v201 = vadd.f32 0.0, %v200
    %v202 = vpop.f32.mrf.mxu0
    %203 = vdwg.mxu0
    %v204 = vadd.f32 %v169, %v201
    %v205 = vld [vmem:[#allocation8] sm:$0xff]
    %v206 = vpack.c.bf16 %v205, %v205
    %v207 = vld [vmem:[#allocation10 + $0x30] sm:$0xf]
    %v208 = vld [vmem:[#allocation10 + $0x34] sm:$0xf]
    %v209 = vld [vmem:[#allocation10 + $0x38] sm:$0xf]
    %v210 = vld [vmem:[#allocation10 + $0x3c] sm:$0xf]
    %v215 = vunpack.c.l.b16 %v207
    %v216 = vunpack.c.l.b16 %v208
    %v217 = vunpack.c.l.b16 %v209
    %v218 = vunpack.c.l.b16 %v210
    %v219 = vpack.c.b16 %v216, %v215
    %v220 = vpack.c.b16 %v218, %v217
    %v224 = vsel %vm114, %v206, 0
    %226 = vmatpush.bf16.msra.mxu0 0
    %227 = vmatpush.bf16.msra.mxu0 0
    %228 = vmatpush.bf16.msra.mxu0 0
    %229 = vmatpush.bf16.msra.mxu0 0
    %230 = vmatpush.bf16.msra.mxu0 0
    %231 = vmatpush.bf16.msra.mxu0 0
    %232 = vmatpush.bf16.msra.mxu0 %v220
    %233 = vmatpush.bf16.msra.mxu0 %v219
    %234 = vmatmul.bf16.gmra.mxu0 %v224
    %v235 = vpop.f32.mrf.mxu0
    %v236 = vadd.f32 0.0, %v235
    %v237 = vpop.f32.mrf.mxu0
    %238 = vdwg.mxu0
    %v239 = vadd.f32 %v204, %v236
    %240 = vmax.xlane.f32.xlu0 %v239
    %v241 = vpop.xlane.xlu0 %240
    %v242 = vsub.f32 %v239, %v241
    %v243 = vmul.f32 %v242, 1.442695
    %v244 = vpow.pop %v243
    %245 = vadd.xlane.f32.xlu0 %v244
    %v246 = vpop.xlane.xlu0 %245
    %v247 = vrcp.pop %v246
    %v248 = vmul.f32 %v246, %v247
    %v249 = vsub.f32 1.0, %v248
    %v250 = vmul.f32 %v247, %v249
    %v251 = vadd.f32 %v247, %v250
    %vm252 = vweird.f32 %v246
    %vm253 = vweird.f32 %v247
    %vm254 = vmor %vm252, %vm253
    %v255 = vsel %vm254, %v247, %v251
    %v256 = vand.u32 2147483647, %v246
    %vm257 = vcmp.eq.f32.partialorder %v256, 8.507059e+37
    %v258 = vand.u32 %v246, 2147483648
    %v259 = vor.u32 1.1754944e-38, %v258
    %v260 = vsel %vm257, %v259, %v255
    %v261 = vmul.f32 %v244, %v260
    %262 = vst [vmem:[#allocation11] sm:$0xff] %v261
    // Predicated region
    $region46: #{_lambda_.1} parent=1 // pred_check
      _
    $region47: #{_lambda_.1} parent=1 // pred_check_branch
      %264 = sbr.rel (0) target = $region49
    $region48: #{_lambda_.1} parent=1 // pred_region
      %266 = vsyncadd [#allocation4], 0
      %s268 = sshll.u32 [#allocation11], 4
      %s269 = int_to_ptr.vmem [resolvable:$true] %s268
      %s270 = sshll.u32 %s6, 4
      %s271 = int_to_ptr.hbm [resolvable:$true] %s270
      %273 = dma.vmem_to_hbm [thread:$0]  %s269, 128, %s271, [#allocation4]
    $region49: #{_lambda_.1} parent=1 // pred_fallthru
      _
    // Predicated region
    $region50: #{_lambda_.1} parent=1 // pred_check
      _
    $region51: #{_lambda_.1} parent=1 // pred_check_branch
      %275 = sbr.rel (0) target = $region53
    $region52: #{_lambda_.1} parent=1 // pred_region
      %277 = dma.done [#allocation4], 128
    $region53: #{_lambda_.1} parent=1 // pred_fallthru
      _
    %278 = vsyncpa [#allocation3], 1
    %279 = vsyncpa [#allocation6], 1
    %280 = vsyncpa [#allocation9], 1
    %281 = vsyncpa [#allocation4], 1

</llo_original>
